<compile_context>
chip_gen: v6e
topology: v6e:2x2x1
jax: 0.10.0
libtpu: 0.0.40
codegen_flags: <defaults>
</compile_context>

<pallas_src>
import functools

import jax
import jax.numpy as jnp
from jax.experimental import pallas as pl
from jax.experimental.pallas import tpu as pltpu


def _gaussian_edge_kernel(d_ref, p_ref, o_ref, *, compute_dtype):
    """One (n_dim, TILE_E) channel-major output tile of the Gaussian RBF expansion.

    d_ref: (1, TILE_E)     distances for this tile (lane-dense)
    p_ref: (n_dim, 2)      column 0 = offsets (0 when centered), column 1 = -0.5/width^2
    o_ref: (n_dim, TILE_E) channel-major filtered distances
    """
    d = d_ref[...].astype(compute_dtype)            # (1, TILE_E)
    p = p_ref[...].astype(compute_dtype)            # (n_dim, 2)
    off = p[:, 0:1]                                 # (n_dim, 1)
    neg_eta = p[:, 1:2]                             # (n_dim, 1)
    diff = d - off                                  # broadcast -> (n_dim, TILE_E)
    o_ref[...] = jnp.exp(neg_eta * (diff * diff)).astype(o_ref.dtype)


def _device_kind():
    try:
        return jax.devices()[0].device_kind.lower()
    except Exception:
        return ""


def _plan_tiles(num_edge, tile_e_max, min_grid_steps):
    """Balanced, lane-aligned edge tiling.

    Derives the tile from the edge count (padding waste < 128 edges per tile) and
    forces >= min_grid_steps grid steps when the edge count allows it, so v7x's
    two TensorCores both get work.
    """
    tile_e_max = max(128, (int(tile_e_max) // 128) * 128)
    cols = pl.cdiv(num_edge, 128)                       # 128-edge lane groups
    n_tiles = max(pl.cdiv(num_edge, tile_e_max), min(int(min_grid_steps), cols))
    tile_cols = pl.cdiv(cols, n_tiles)
    n_tiles = pl.cdiv(cols, tile_cols)                  # drop empty tail tiles
    tile_e = tile_cols * 128
    return tile_e, n_tiles, tile_e * n_tiles


def distance2gaussian_edge_channel_major(distances, offsets, widths, centered=False, *,
                                         out_dtype=jnp.bfloat16, compute_dtype=None,
                                         tile_e_max=32768, min_grid_steps=8):
    """Gaussian RBF edge filter, returned CHANNEL-MAJOR: shape (n_dim, num_edge).

    This is the recommended fast path (no transpose pass): consume it directly, e.g.
    the downstream SchNet dense layer `filtered @ W` becomes `(W.T @ out_cm).T` /
    a dot_general contracting the n_dim axis of out_cm.

    distances: (num_edge,) float; offsets, widths: (n_dim,) float.
    out_dtype defaults to bf16 (output is 20x the input volume -> HBM writes dominate;
    bf16 halves them).  Pass jnp.float32 for exact module numerics.

    Note (mirrors the PyTorch reference): centered=True with an offsets vector that
    contains 0.0 (e.g. a linspace starting at 0) gives -0.5/0 = -inf eta and NaN/0
    for that channel.
    """
    E = int(distances.shape[0])
    n_dim = int(offsets.shape[0])

    tile_e, n_tiles, e_pad = _plan_tiles(E, tile_e_max, min_grid_steps)

    # bf16 compute only where the EUP/VPU support it (v6e / v7x); v5e stays f32 and
    # only the final store is cast.
    if compute_dtype is None:
        kind = _device_kind()
        wants_bf16 = jnp.dtype(out_dtype).itemsize <= 2
        has_bf16_math = ("v6" in kind) or ("v7" in kind)
        compute_dtype = jnp.bfloat16 if (wants_bf16 and has_bf16_math) else jnp.float32

    offsets = offsets.astype(jnp.float32)
    widths = widths.astype(jnp.float32)
    if centered:
        neg_eta = -0.5 / jnp.square(offsets)            # may be -inf if offset==0 (as in torch)
        off_used = jnp.zeros_like(offsets)              # diff = d - 0 = d
    else:
        neg_eta = -0.5 / jnp.square(widths)
        off_used = offsets
    params = jnp.stack([off_used, neg_eta], axis=1)     # (n_dim, 2) packed side input

    d_row = distances.astype(jnp.float32).reshape(1, E)
    if e_pad != E:
        d_row = jnp.pad(d_row, ((0, 0), (0, e_pad - E)))

    # Conservative VMEM estimate (double-buffered in + out); only raise the scoped
    # limit when a caller-supplied tile actually needs it (default 32768-edge tiles
    # need ~8-9 MiB, inside v5e's 16 MiB scoped default).
    out_rows_pad = ((n_dim + 31) // 32) * 32
    est_vmem = (2 * 8 * tile_e * 4
                + 2 * out_rows_pad * tile_e * jnp.dtype(out_dtype).itemsize
                + (2 << 20))
    vmem_limit = int(est_vmem + (8 << 20)) if est_vmem > (12 << 20) else None

    out_cm = pl.pallas_call(
        functools.partial(_gaussian_edge_kernel, compute_dtype=compute_dtype),
        out_shape=jax.ShapeDtypeStruct((n_dim, e_pad), out_dtype),
        grid_spec=pltpu.PrefetchScalarGridSpec(
            num_scalar_prefetch=0,
            grid=(n_tiles,),
            in_specs=[
                pl.BlockSpec((1, tile_e), lambda i: (0, i)),   # distances row
                pl.BlockSpec((n_dim, 2), lambda i: (0, 0)),    # [offsets | -eta]
            ],
            out_specs=pl.BlockSpec((n_dim, tile_e), lambda i: (0, i)),
        ),
        compiler_params=pltpu.CompilerParams(
            dimension_semantics=("parallel",),                 # megacore-shardable edges
            vmem_limit_bytes=vmem_limit,
        ),
    )(d_row, params)

    if e_pad == E:
        return out_cm
    # Anyone keeping the padded (n_dim, e_pad) array instead must mask/slice the tail.
    return out_cm[:, :E]


def distance2gaussian_edge(distances, offsets, widths, centered=False, *,
                           out_dtype=jnp.float32, **kwargs):
    """Module-compatible wrapper: returns (num_edge, n_dim), float32 by default.

    The `.T` below is a second memory-bound pass; for performance, consume
    `distance2gaussian_edge_channel_major` directly (or fuse the transpose into the
    downstream contraction) instead of materializing the (num_edge, n_dim) layout.
    """
    out_cm = distance2gaussian_edge_channel_major(
        distances, offsets, widths, centered, out_dtype=out_dtype, **kwargs)
    return out_cm.T


if __name__ == "__main__":
    # Deterministic parameter init, matching nn.Module.__init__:
    start, stop, n_dim, centered = 0.0, 6.0, 20, False
    offset = jnp.linspace(start, stop, n_dim, dtype=jnp.float32)
    width = (offset[1] - offset[0]) * jnp.ones_like(offset)

    key = jax.random.PRNGKey(0)
    k_d, k_w = jax.random.split(key)
    num_edge = 200  # small, deliberately NOT a multiple of 128 (exercises balanced padding)
    distances = jax.random.uniform(k_d, (num_edge,), dtype=jnp.float32,
                                   minval=0.0, maxval=6.0)

    # Reference (same math as the PyTorch gaussian_filter).
    eta_ref = 0.5 / jnp.square(width)
    diff_ref = distances[:, None] - offset[None, :]
    ref = jnp.exp(-eta_ref * diff_ref * diff_ref)                 # (E, n_dim) f32

    # 1) Module-compatible (num_edge, n_dim) float32 path.
    out_em = jax.block_until_ready(
        distance2gaussian_edge(distances, offset, width, centered=centered))
    assert out_em.shape == (num_edge, n_dim) and out_em.dtype == jnp.float32
    assert jnp.allclose(out_em, ref, atol=1e-5, rtol=1e-5)

    # 2) Recommended transpose-free channel-major path (f32 for an exact check).
    out_cm = jax.block_until_ready(
        distance2gaussian_edge_channel_major(distances, offset, width,
                                             centered=centered,
                                             out_dtype=jnp.float32))
    assert out_cm.shape == (n_dim, num_edge)
    assert jnp.allclose(out_cm, ref.T, atol=1e-5, rtol=1e-5)

    # 3) Recommended bf16 output (halves the dominant HBM write traffic).
    out_bf = jax.block_until_ready(
        distance2gaussian_edge_channel_major(distances, offset, width,
                                             centered=centered))
    assert out_bf.shape == (n_dim, num_edge) and out_bf.dtype == jnp.bfloat16
    assert float(jnp.max(jnp.abs(out_bf.astype(jnp.float32) - ref.T))) < 5e-2

    # 4) "Fuse the transpose into the downstream op": the SchNet dense layer
    #    filtered @ W is computed directly from the channel-major layout, so the
    #    (num_edge, n_dim) array is never materialized.
    feat = 8
    w = jax.random.normal(k_w, (n_dim, feat), dtype=jnp.float32)
    y_fused_t = jnp.dot(w.T, out_cm)                              # (feat, E)
    y_ref = jnp.dot(ref, w)                                       # (E, feat)
    assert jnp.allclose(y_fused_t.T, y_ref, atol=1e-4, rtol=1e-4)

    print("KERNEL_OK")
</pallas_src>

<mosaic_0001>
module attributes {stable_mosaic.version = 11 : i64} {
  func.func @_gaussian_edge_kernel(%arg0: i32, %arg1: memref<1x128xf32, #tpu.memory_space<vmem>>, %arg2: memref<20x2xf32, #tpu.memory_space<vmem>>, %arg3: memref<20x128xf32, #tpu.memory_space<vmem>>) attributes {dimension_semantics = [#tpu.dimension_semantics<parallel>], iteration_bounds = array<i64: 2>, scalar_prefetch = 0 : i64, scratch_operands = 0 : i64, tpu.core_type = #tpu.core_type<tc>, window_params = [{transform_indices = @transform_0, window_bounds = array<i64: 1, 128>}, {pipeline_mode = #tpu.pipeline_mode<synchronous>, transform_indices = @transform_1, window_bounds = array<i64: 20, 2>}, {transform_indices = @transform_2, window_bounds = array<i64: 20, 128>}]} {
    %c0 = arith.constant 0 : index
    %c0_0 = arith.constant 0 : index
    %0 = vector.load %arg1[%c0, %c0_0] : memref<1x128xf32, #tpu.memory_space<vmem>>, vector<1x128xf32>
    %c0_1 = arith.constant 0 : index
    %c0_2 = arith.constant 0 : index
    %1 = vector.load %arg2[%c0_1, %c0_2] : memref<20x2xf32, #tpu.memory_space<vmem>>, vector<20x2xf32>
    %2 = vector.extract_strided_slice %1 {offsets = [0, 0], sizes = [20, 1], strides = [1, 1]} : vector<20x2xf32> to vector<20x1xf32>
    %3 = vector.extract_strided_slice %1 {offsets = [0, 1], sizes = [20, 1], strides = [1, 1]} : vector<20x2xf32> to vector<20x1xf32>
    %4 = vector.broadcast %0 : vector<1x128xf32> to vector<20x128xf32>
    %5 = vector.broadcast %2 : vector<20x1xf32> to vector<20x128xf32>
    %6 = arith.subf %4, %5 : vector<20x128xf32>
    %7 = arith.mulf %6, %6 : vector<20x128xf32>
    %8 = vector.broadcast %3 : vector<20x1xf32> to vector<20x128xf32>
    %9 = arith.mulf %8, %7 : vector<20x128xf32>
    %10 = math.exp %9 : vector<20x128xf32>
    %c0_3 = arith.constant 0 : index
    %c0_4 = arith.constant 0 : index
    %11 = vector.load %arg3[%c0_3, %c0_4] : memref<20x128xf32, #tpu.memory_space<vmem>>, vector<20x128xf32>
    tpu.vector_store %arg3[%c0_3, %c0_4], %10 {strides = array<i32>} : memref<20x128xf32, #tpu.memory_space<vmem>>, vector<20x128xf32>,
    return
  }
  func.func @transform_0(%arg0: i32) -> (i32, i32) {
    %c0_i32 = arith.constant 0 : i32
    %c0_i32_0 = arith.constant 0 : i32
    return %c0_i32, %arg0 : i32, i32
  }
  func.func @transform_1(%arg0: i32) -> (i32, i32) {
    %c0_i32 = arith.constant 0 : i32
    %c0_i32_0 = arith.constant 0 : i32
    %c0_i32_1 = arith.constant 0 : i32
    return %c0_i32, %c0_i32_0 : i32, i32
  }
  func.func @transform_2(%arg0: i32) -> (i32, i32) {
    %c0_i32 = arith.constant 0 : i32
    %c0_i32_0 = arith.constant 0 : i32
    return %c0_i32, %arg0 : i32, i32
  }
}

</mosaic_0001>

<llo_original>
// kernel: tpu_custom_call.1
$region0: #{tpu_custom_call.1}
  #allocation0 [shape = 'u32[]', space=smem, size = 0x4, offset = 0x4, fixed_abs, tag = 'smem constant byte address 0x4 - core index']
  #allocation1 [shape = 'u32[144,128]{1,0:T(1,128)}', space=vmem, size = 0x12000, scoped, tag = 'internal scratch']
  %s0 = inlined_call_operand.vmem [shape: f32[1,256], index: 0, kind: input, shape index: {}]
  %s1 = inlined_call_operand.vmem [shape: f32[20,2], index: 1, kind: input, shape index: {}]
  %s2 = inlined_call_operand.hbm [shape: f32[20,256], index: 2, kind: output, shape index: {}]
  %s3 = sld [smem:[#allocation0]]
  $region41: #{tpu_custom_call.1} parent=0
    _
  %s5 = ssub.s32 1, %s3
  %s6 = scalar_select 0, %s5, %s3
  $region1: #{tpu_custom_call.1} parent=0
    #allocation2 [shape = 'u8[24576]{0}', space=vmem, size = 0x6000, scoped, tag = 'output window, operand 0']
    #allocation3 [shape = 's32[2]{0}', space=sflag, size = 0x8, scoped, tag = 'scoped memory for tpu_custom_call.1']
    %7 = vsyncpa [#allocation3], 0
    %s8 = scalar_lea.sflag [#allocation3], 1
    %9 = vsyncpa %s8, 0
    loop: start=0, step=1, limit=4
    $region2: #{tpu_custom_call.1} parent=1 // loop_pre_header
      _
    $region3: #{tpu_custom_call.1} parent=1 // loop_header
      %s11 = sphi 0, %s15
      %p12 = scmp.ge.s32.totalorder %s11, 4
      %s21 = sphi 0, %s23
      %s24 = sphi 0, %s21
      %s25 = sphi 0, %s24
      %s41 = sphi 0, %s25
      %s45 = sphi 0, %s45
      %s47 = sphi 0, %s45
      %s48 = sphi 0, %s47
      %s62 = sphi 0, %s48
      %s68 = sphi 0, %s70
      %s71 = sphi 0, %s68
      %s72 = sphi 0, %s71
      %s88 = sphi 0, %s72
    $region4: #{tpu_custom_call.1} parent=1 // loop_header_branch
      %14 = sbr.rel (%p12) target = $region8
    $region5: #{tpu_custom_call.1} parent=1 // loop_body
      %s16 = ssub.s32 %s11, 1
      %s17 = ssub.s32 %s11, 2
      %s18 = sadd.s32 %s11, 1
      %s19 = ssub.s32 %s11, %s18
      %p20 = scmp.eq.s32.totalorder %s19, 0
      %s22 = sadd.s32 %s21, 1
      %s23 = scalar_select %p20, %s21, %s22
      %p26 = pneg %p20
      %p27 = scmp.eq.s32.totalorder %s11, 1
      %p28 = por %p26, %p27
      %p29 = scmp.ne.s32.totalorder %s21, %s24
      %p30 = scmp.eq.s32.totalorder %s11, 0
      %p31 = por %p29, %p30
      %p32 = scmp.ne.s32.totalorder %s21, %s24
      %p33 = scmp.eq.s32.totalorder %s16, 1
      %p34 = por %p32, %p33
      %p35 = scmp.ne.s32.totalorder %s24, %s25
      %p36 = scmp.eq.s32.totalorder %s16, 0
      %p37 = por %p35, %p36
      %p38 = scmp.ne.s32.totalorder %s24, %s25
      %p39 = scmp.eq.s32.totalorder %s17, 1
      %p40 = por %p38, %p39
      %p42 = scmp.ne.s32.totalorder %s25, %s41
      %p43 = scmp.eq.s32.totalorder %s17, 0
      %p44 = por %p42, %p43
      %s46 = sadd.s32 %s45, 1
      %p49 = scmp.eq.s32.totalorder %s11, 1
      %p50 = scmp.ne.s32.totalorder %s45, %s47
      %p51 = scmp.eq.s32.totalorder %s11, 0
      %p52 = por %p50, %p51
      %p53 = scmp.ne.s32.totalorder %s45, %s47
      %p54 = scmp.eq.s32.totalorder %s16, 1
      %p55 = por %p53, %p54
      %p56 = scmp.ne.s32.totalorder %s47, %s48
      %p57 = scmp.eq.s32.totalorder %s16, 0
      %p58 = por %p56, %p57
      %p59 = scmp.ne.s32.totalorder %s47, %s48
      %p60 = scmp.eq.s32.totalorder %s17, 1
      %p61 = por %p59, %p60
      %p63 = scmp.ne.s32.totalorder %s48, %s62
      %p64 = scmp.eq.s32.totalorder %s17, 0
      %p65 = por %p63, %p64
      %s66 = ssub.s32 %s11, %s18
      %p67 = scmp.eq.s32.totalorder %s66, 0
      %s69 = sadd.s32 %s68, 1
      %s70 = scalar_select %p67, %s68, %s69
      %p73 = pneg %p67
      %p74 = scmp.eq.s32.totalorder %s11, 1
      %p75 = por %p73, %p74
      %p76 = scmp.ne.s32.totalorder %s68, %s71
      %p77 = scmp.eq.s32.totalorder %s11, 0
      %p78 = por %p76, %p77
      %p79 = scmp.ne.s32.totalorder %s68, %s71
      %p80 = scmp.eq.s32.totalorder %s16, 1
      %p81 = por %p79, %p80
      %p82 = scmp.ne.s32.totalorder %s71, %s72
      %p83 = scmp.eq.s32.totalorder %s16, 0
      %p84 = por %p82, %p83
      %p85 = scmp.ne.s32.totalorder %s71, %s72
      %p86 = scmp.eq.s32.totalorder %s17, 1
      %p87 = por %p85, %p86
      %p89 = scmp.ne.s32.totalorder %s72, %s88
      %p90 = scmp.eq.s32.totalorder %s17, 0
      %p91 = por %p89, %p90
      %p92 = scmp.le.s32.totalorder 1, %s11
      %p93 = scmp.lt.s32.totalorder %s11, 3
      %p94 = pnand %p92, %p93
      %p95 = pneg %p94
      // Predicated region
      $region9: #{tpu_custom_call.1} parent=5 // pred_check
        _
      $region10: #{tpu_custom_call.1} parent=5 // pred_check_branch
        %97 = sbr.rel (%p94) target = $region12
      $region11: #{tpu_custom_call.1} parent=5 // pred_region
        %s98 = ssub.s32 %s11, 1
        // Predicated region
        $region13: #{tpu_custom_call.1} parent=11 // pred_check
          %p99 = pneg %p58
        $region14: #{tpu_custom_call.1} parent=11 // pred_check_branch
          %101 = sbr.rel (%p99) target = $region16
        $region15: #{tpu_custom_call.1} parent=11 // pred_region
          _
        $region16: #{tpu_custom_call.1} parent=11 // pred_fallthru
          _
      $region12: #{tpu_custom_call.1} parent=5 // pred_fallthru
        _
      %p102 = scmp.lt.s32.totalorder %s11, 2
      // Predicated region
      $region17: #{tpu_custom_call.1} parent=5 // pred_check
        %p103 = pneg %p102
      $region18: #{tpu_custom_call.1} parent=5 // pred_check_branch
        %105 = sbr.rel (%p103) target = $region20
      $region19: #{tpu_custom_call.1} parent=5 // pred_region
        // Predicated region
        $region21: #{tpu_custom_call.1} parent=19 // pred_check
          %p106 = pneg %p31
        $region22: #{tpu_custom_call.1} parent=19 // pred_check_branch
          %108 = sbr.rel (%p106) target = $region24
        $region23: #{tpu_custom_call.1} parent=19 // pred_region
          %p109 = scmp.lt.s32.totalorder %s11, 1
          %s110 = scalar_select %p109, %s11, 1
          %s111 = scalar_lea.vmem %s0, %s110
        $region24: #{tpu_custom_call.1} parent=19 // pred_fallthru
          _
      $region20: #{tpu_custom_call.1} parent=5 // pred_fallthru
        _
      %p112 = scmp.le.s32.totalorder 1, %s11
      %p113 = scmp.lt.s32.totalorder %s11, 3
      %p114 = pnand %p112, %p113
      %p115 = pneg %p114
      // Predicated region
      $region25: #{tpu_custom_call.1} parent=5 // pred_check
        _
      $region26: #{tpu_custom_call.1} parent=5 // pred_check_branch
        %117 = sbr.rel (%p114) target = $region28
      $region27: #{tpu_custom_call.1} parent=5 // pred_region
        %s118 = ssub.s32 %s11, 1
        %p119 = scmp.lt.s32.totalorder %s16, 1
        %s120 = scalar_select %p119, %s16, 1
        %s121 = scalar_lea.vmem %s0, %s120
        %p122 = pneg %p37
        %p123 = pneg %p34
        %p124 = pneg %p58
        %p125 = pneg %p55
        %p126 = pneg %p84
        %p127 = pneg %p81
        %s128 = sand.u32 %s71, 1
        %s129 = scalar_lea.sflag [#allocation3], %s128
        %s130 = sand.u32 %s71, 1
        %s131 = smul.addr %s130, 24
        %s132 = scalar_lea.vmem [#allocation2], %s131
        %p133 = scmp.lt.s32.totalorder %s16, 1
        %s134 = scalar_select %p133, %s16, 1
        %s135 = scalar_lea.vmem %s0, %s134
        %v136 = vld [vmem:[%s135] sm:$0x1]
        %v137 = vld [vmem:[%s1] sm:$0xff]
        %v138 = vld [vmem:[%s1 + $0x8] sm:$0xff]
        %v139 = vld [vmem:[%s1 + $0x10] sm:$0xf]
        %v141 = vlaneseq
        %v142 = vshrl.u32 %v141, 7
        %v143 = vsub.s32 0, %v142
        %v144 = vrot.slane %v136, %v143
        %147 = vset.pattern.permute.xlu0 0
        %148 = vperm.xlu0 %147, %v137
        %v149 = vpop.permute.xlu0 %148
        %152 = vset.pattern.permute.xlu0 0
        %153 = vperm.xlu0 %152, %v138
        %v154 = vpop.permute.xlu0 %153
        %157 = vset.pattern.permute.xlu0 0
        %158 = vperm.xlu0 %157, %v139
        %v159 = vpop.permute.xlu0 %158
        %v161 = vsub.f32 %v144, %v149
        %v162 = vsub.f32 %v144, %v154
        %v163 = vsub.f32 %v144, %v159
        %v164 = vmul.f32 %v161, %v161
        %v165 = vmul.f32 %v162, %v162
        %v166 = vmul.f32 %v163, %v163
        %167 = vset.pattern.permute.xlu0 1
        %168 = vperm.xlu0 %167, %v137
        %v169 = vpop.permute.xlu0 %168
        %171 = vset.pattern.permute.xlu0 1
        %172 = vperm.xlu0 %171, %v138
        %v173 = vpop.permute.xlu0 %172
        %175 = vset.pattern.permute.xlu0 1
        %176 = vperm.xlu0 %175, %v139
        %v177 = vpop.permute.xlu0 %176
        %v179 = vmul.f32 %v169, %v164
        %v180 = vmul.f32 %v173, %v165
        %v181 = vmul.f32 %v177, %v166
        %v182 = vmul.f32 %v179, 1.442695
        %v183 = vpow.pop %v182
        %v184 = vmul.f32 %v180, 1.442695
        %v185 = vpow.pop %v184
        %v186 = vmul.f32 %v181, 1.442695
        %v187 = vpow.pop %v186
        %188 = vst [vmem:[%s132] sm:$0xff] %v183
        %189 = vst [vmem:[%s132 + $0x8] sm:$0xff] %v185
        %190 = vst [vmem:[%s132 + $0x10] sm:$0xf] %v187
        %s191 = sand.u32 %s71, 1
        %s192 = scalar_lea.sflag [#allocation3], %s191
        %s193 = sand.u32 %s71, 1
        %s194 = smul.addr %s193, 24
        %s195 = scalar_lea.vmem [#allocation2], %s194
        // Predicated region
        $region29: #{tpu_custom_call.1} parent=27 // pred_check
          %p196 = pneg %p81
        $region30: #{tpu_custom_call.1} parent=27 // pred_check_branch
          %198 = sbr.rel (%p196) target = $region32
        $region31: #{tpu_custom_call.1} parent=27 // pred_region
          %s200 = ssub.s32 384, 384
          %201 = vsyncadd %s192, %s200
          %s202 = smul.addr %s16, 128
          %s203 = scalar_lea.hbm %s2, %s202
          %s204 = sshll.u32 %s195, 4
          %s205 = int_to_ptr.vmem [resolvable:$true] %s204
          %210 = dma.vmem_to_hbm [thread:$0]  %s205, 384, %s203, %s192, 128, 256, 8
        $region32: #{tpu_custom_call.1} parent=27 // pred_fallthru
          _
      $region28: #{tpu_custom_call.1} parent=5 // pred_fallthru
        _
      %p211 = scmp.le.s32.totalorder 2, %s11
      // Predicated region
      $region33: #{tpu_custom_call.1} parent=5 // pred_check
        %p212 = pneg %p211
      $region34: #{tpu_custom_call.1} parent=5 // pred_check_branch
        %214 = sbr.rel (%p212) target = $region36
      $region35: #{tpu_custom_call.1} parent=5 // pred_region
        %s215 = ssub.s32 %s11, 2
        // Predicated region
        $region37: #{tpu_custom_call.1} parent=35 // pred_check
          %p216 = pneg %p87
        $region38: #{tpu_custom_call.1} parent=35 // pred_check_branch
          %218 = sbr.rel (%p216) target = $region40
        $region39: #{tpu_custom_call.1} parent=35 // pred_region
          %s219 = sand.u32 %s72, 1
          %s220 = scalar_lea.sflag [#allocation3], %s219
          %s221 = sand.u32 %s72, 1
          %s222 = smul.addr %s221, 24
          %s223 = scalar_lea.vmem [#allocation2], %s222
          %224 = dma.done %s220, 384
        $region40: #{tpu_custom_call.1} parent=35 // pred_fallthru
          _
      $region36: #{tpu_custom_call.1} parent=5 // pred_fallthru
        _
    $region6: #{tpu_custom_call.1} parent=1 // loop_footer
      %s15 = sadd.s32 1, %s11
    $region7: #{tpu_custom_call.1} parent=1 // loop_footer_branch
      %10 = sbr.rel target = $region3
    $region8: #{tpu_custom_call.1} parent=1 // loop_exit
      _
    %225 = vsyncpa [#allocation3], 1
    %s226 = scalar_lea.sflag [#allocation3], 1
    %227 = vsyncpa %s226, 1

</llo_original>
